<compile_context>
chip_gen: v7x
topology: tpu7x:2x2x1
jax: 0.10.0
libtpu: 0.0.40
codegen_flags: <defaults>
</compile_context>

<pallas_src>
import functools

import jax
import jax.numpy as jnp
from jax import lax
from jax.experimental import pallas as pl
from jax.experimental.pallas import tpu as pltpu


# ---------------------------------------------------------------------------
# Kernel bodies
# ---------------------------------------------------------------------------

def _sumsq(x_ref, *, partial_size, dim):
    """Sum of squares over the (possibly partial) feature axis, in f32."""
    if partial_size == dim:
        xf = x_ref[...].astype(jnp.float32)
        return jnp.sum(xf * xf, axis=-1, keepdims=True)
    if partial_size % 128 == 0:
        # Lane-aligned prefix slice: no masking needed, full-width reduction.
        xf = x_ref[:, :partial_size].astype(jnp.float32)
        return jnp.sum(xf * xf, axis=-1, keepdims=True)
    # Non-128-aligned partial size: mask lanes instead of a ragged slice so
    # the reduction stays lane-aligned.
    xf = x_ref[...].astype(jnp.float32)
    lane = lax.broadcasted_iota(jnp.int32, xf.shape, dimension=xf.ndim - 1)
    xp = jnp.where(lane < partial_size, xf, 0.0)
    return jnp.sum(xp * xp, axis=-1, keepdims=True)


def _inv_rms(sumsq, *, d_x, eps):
    # rms = sqrt(sumsq / d_x); semantics of the reference: 1 / (rms + eps).
    rms = jnp.sqrt(sumsq) * (float(d_x) ** -0.5)
    return pl.reciprocal(rms + eps, approx=False)


def _rmsnorm_kernel_affine(x_ref, scale_ref, bias_ref, o_ref, *,
                           partial_size, dim, d_x, eps):
    inv = _inv_rms(_sumsq(x_ref, partial_size=partial_size, dim=dim),
                   d_x=d_x, eps=eps)
    # Second, independent read of x_ref: avoids keeping a full-tile f32 copy
    # live across the reduction. scale/bias are already f32 (cast in wrapper).
    y = x_ref[...].astype(jnp.float32) * inv
    y = y * scale_ref[...] + bias_ref[...]
    o_ref[...] = y.astype(o_ref.dtype)


def _rmsnorm_kernel_plain(x_ref, o_ref, *, partial_size, dim, d_x, eps):
    inv = _inv_rms(_sumsq(x_ref, partial_size=partial_size, dim=dim),
                   d_x=d_x, eps=eps)
    y = x_ref[...].astype(jnp.float32) * inv
    o_ref[...] = y.astype(o_ref.dtype)


# ---------------------------------------------------------------------------
# Generation-aware tile sizing
# ---------------------------------------------------------------------------

_SUBLANE_F32 = 8
_ABS_MAX_BLOCK_ROWS = 32768  # generous sanity bound; VMEM budget binds first


def _vmem_limits():
    """(vmem_limit_bytes, per-step buffer budget bytes), generation-aware."""
    try:
        info = pltpu.get_tpu_info()
        cap = getattr(info, "vmem_capacity_bytes", None)
    except Exception:
        cap = None
    if cap is None:
        cap = 64 * 1024 * 1024           # conservative: assume v7x-class VMEM
    if cap <= 64 * 1024 * 1024:          # v7x: 64 MiB physical per TC
        vmem_limit = 40 * 1024 * 1024
    else:                                # v5e / v6e: 128 MiB physical
        vmem_limit = 64 * 1024 * 1024
    # Leave ~half of the scoped limit for compiler scratch / headroom.
    return vmem_limit, vmem_limit // 2


def _choose_block_rows(rows, dim, dtype, budget_bytes):
    """Largest row tile fitting the VMEM budget, aligned to sublane packing."""
    itemsize = jnp.dtype(dtype).itemsize
    packing = max(1, 4 // max(itemsize, 1))   # rows per sublane for sub-32-bit
    sublane = _SUBLANE_F32 * packing          # 8 (f32), 16 (bf16), 32 (int8)

    # Per row of a block: 2x double-buffered input + 2x double-buffered output
    # in the input dtype, plus ~3 f32 tile-rows of transient headroom.
    bytes_per_row = max(dim * (4 * itemsize + 3 * 4), 1)
    br = budget_bytes // bytes_per_row
    br = max(sublane, min(br, _ABS_MAX_BLOCK_ROWS))
    br = (br // sublane) * sublane
    if rows <= br:
        # Single block spanning the full row extent — always a legal shape.
        return rows
    return br


# ---------------------------------------------------------------------------
# Public wrapper
# ---------------------------------------------------------------------------

def rmsnorm(x, scale=None, bias=None, *, p=None, eps=1e-8, affine=True):
    """RMSNorm over the last axis of x. scale/bias have shape (dim,)."""
    orig_shape = x.shape
    dim = orig_shape[-1]
    rows = 1
    for s in orig_shape[:-1]:
        rows *= s
    x2 = x.reshape(rows, dim)

    if p is None:
        partial_size = dim
    else:
        assert 0.0 < p < 1.0, "p must be between 0 and 1"
        partial_size = int(dim * p)
        assert partial_size >= 1, "partial normalization size must be >= 1"
    d_x = partial_size

    vmem_limit_bytes, budget_bytes = _vmem_limits()
    block_rows = _choose_block_rows(rows, dim, x.dtype, budget_bytes)
    grid = (pl.cdiv(rows, block_rows),)        # ragged last block is masked

    x_spec = pl.BlockSpec((block_rows, dim), lambda i: (i, 0))
    out_spec = pl.BlockSpec((block_rows, dim), lambda i: (i, 0))

    if affine:
        kernel = functools.partial(
            _rmsnorm_kernel_affine,
            partial_size=partial_size, dim=dim, d_x=d_x, eps=eps)
        in_specs = [
            x_spec,
            pl.BlockSpec((1, dim), lambda i: (0, 0)),
            pl.BlockSpec((1, dim), lambda i: (0, 0)),
        ]
        operands = (
            x2,
            scale.astype(jnp.float32).reshape(1, dim),   # pre-cast once
            bias.astype(jnp.float32).reshape(1, dim),
        )
    else:
        kernel = functools.partial(
            _rmsnorm_kernel_plain,
            partial_size=partial_size, dim=dim, d_x=d_x, eps=eps)
        in_specs = [x_spec]
        operands = (x2,)

    out = pl.pallas_call(
        kernel,
        out_shape=jax.ShapeDtypeStruct((rows, dim), x.dtype),
        grid_spec=pltpu.PrefetchScalarGridSpec(
            num_scalar_prefetch=0,
            grid=grid,
            in_specs=in_specs,
            out_specs=out_spec,
        ),
        compiler_params=pltpu.CompilerParams(
            # 'parallel' lets the row grid shard across v7x's two TensorCores;
            # harmless no-op on single-TC v5e/v6e.
            dimension_semantics=("parallel",),
            vmem_limit_bytes=vmem_limit_bytes,
        ),
    )(*operands)

    return out.reshape(orig_shape)


# ---------------------------------------------------------------------------
# Pure-JAX reference (mirrors the PyTorch forward)
# ---------------------------------------------------------------------------

def rmsnorm_ref(x, scale=None, bias=None, *, p=None, eps=1e-8, affine=True):
    dim = x.shape[-1]
    if p is None:
        part = x
        d_x = dim
    else:
        d_x = int(dim * p)
        part = x[..., :d_x]
    norm_x = jnp.linalg.norm(part.astype(jnp.float32), axis=-1, keepdims=True)
    rms_x = norm_x * (float(d_x) ** -0.5)
    x_hat = x.astype(jnp.float32) / (rms_x + eps)
    if affine:
        x_hat = x_hat * scale.astype(jnp.float32) + bias.astype(jnp.float32)
    return x_hat.astype(x.dtype)


if __name__ == "__main__":
    key = jax.random.PRNGKey(0)

    # --- Small demo matching the module spec: batch=2, seq=8, hidden=32. ---
    batch, seq, hidden = 2, 8, 32
    x = jax.random.normal(key, (batch, seq, hidden), dtype=jnp.float32)
    # nn.Parameter(torch.ones(dim)) / torch.zeros(dim)
    scale = jnp.ones((hidden,), dtype=jnp.float32)
    bias = jnp.zeros((hidden,), dtype=jnp.float32)

    # Full RMSNorm (p=None), affine.
    y = jax.block_until_ready(rmsnorm(x, scale, bias, p=None, eps=1e-8, affine=True))
    y_ref = rmsnorm_ref(x, scale, bias, p=None, eps=1e-8, affine=True)
    assert jnp.allclose(y, y_ref, atol=1e-5, rtol=1e-5)

    # Partial RMSNorm (p=0.5) — exercises the non-128-aligned lane-mask path.
    y_p = jax.block_until_ready(rmsnorm(x, scale, bias, p=0.5, eps=1e-8, affine=True))
    y_p_ref = rmsnorm_ref(x, scale, bias, p=0.5, eps=1e-8, affine=True)
    assert jnp.allclose(y_p, y_p_ref, atol=1e-5, rtol=1e-5)

    # No affine params — exercises the scale/bias-free kernel variant.
    y_n = jax.block_until_ready(rmsnorm(x, p=None, eps=1e-8, affine=False))
    y_n_ref = rmsnorm_ref(x, p=None, eps=1e-8, affine=False)
    assert jnp.allclose(y_n, y_n_ref, atol=1e-5, rtol=1e-5)

    # --- Lane-aligned "production-like" path: dim=256 (multiple of 128),  ---
    # --- non-multiple-of-8 row count, and 128-aligned partial size.       ---
    b2, s2, h2 = 3, 7, 256
    x2 = jax.random.normal(jax.random.PRNGKey(1), (b2, s2, h2), dtype=jnp.float32)
    sc2 = jnp.ones((h2,), dtype=jnp.float32)
    bi2 = jnp.zeros((h2,), dtype=jnp.float32)

    y2 = jax.block_until_ready(rmsnorm(x2, sc2, bi2, p=None, eps=1e-8, affine=True))
    y2_ref = rmsnorm_ref(x2, sc2, bi2, p=None, eps=1e-8, affine=True)
    assert jnp.allclose(y2, y2_ref, atol=1e-5, rtol=1e-5)

    y2p = jax.block_until_ready(rmsnorm(x2, sc2, bi2, p=0.5, eps=1e-8, affine=True))
    y2p_ref = rmsnorm_ref(x2, sc2, bi2, p=0.5, eps=1e-8, affine=True)
    assert jnp.allclose(y2p, y2p_ref, atol=1e-5, rtol=1e-5)

    print("KERNEL_OK")
</pallas_src>

<mosaic_0001>
module attributes {stable_mosaic.version = 11 : i64} {
  func.func @_rmsnorm_kernel_affine(%arg0: i32, %arg1: memref<16x32xf32, #tpu.memory_space<vmem>>, %arg2: memref<1x32xf32, #tpu.memory_space<vmem>>, %arg3: memref<1x32xf32, #tpu.memory_space<vmem>>, %arg4: memref<16x32xf32, #tpu.memory_space<vmem>>) attributes {dimension_semantics = [#tpu.dimension_semantics<parallel>], iteration_bounds = array<i64: 1>, scalar_prefetch = 0 : i64, scratch_operands = 0 : i64, tpu.core_type = #tpu.core_type<tc>, window_params = [{transform_indices = @transform_0, window_bounds = array<i64: 16, 32>}, {pipeline_mode = #tpu.pipeline_mode<synchronous>, transform_indices = @transform_1, window_bounds = array<i64: 1, 32>}, {pipeline_mode = #tpu.pipeline_mode<synchronous>, transform_indices = @transform_2, window_bounds = array<i64: 1, 32>}, {transform_indices = @transform_3, window_bounds = array<i64: 16, 32>}]} {
    %c0 = arith.constant 0 : index
    %c0_0 = arith.constant 0 : index
    %0 = vector.load %arg1[%c0, %c0_0] : memref<16x32xf32, #tpu.memory_space<vmem>>, vector<16x32xf32>
    %1 = arith.mulf %0, %0 : vector<16x32xf32>
    %cst = arith.constant dense<0.000000e+00> : vector<16xf32>
    %2 = vector.multi_reduction <add>, %1, %cst [1] : vector<16x32xf32> to vector<16xf32>
    %3 = vector.shape_cast %2 : vector<16xf32> to vector<16x1xf32>
    %4 = math.sqrt %3 : vector<16x1xf32>
    %cst_1 = arith.constant 0.176776692 : f32
    %5 = vector.broadcast %cst_1 : f32 to vector<16x1xf32>
    %6 = arith.mulf %4, %5 : vector<16x1xf32>
    %cst_2 = arith.constant 9.99999993E-9 : f32
    %7 = vector.broadcast %cst_2 : f32 to vector<16x1xf32>
    %8 = arith.addf %6, %7 : vector<16x1xf32>
    %9 = tpu.reciprocal %8 : vector<16x1xf32> -> vector<16x1xf32>
    %c0_3 = arith.constant 0 : index
    %c0_4 = arith.constant 0 : index
    %10 = vector.load %arg1[%c0_3, %c0_4] : memref<16x32xf32, #tpu.memory_space<vmem>>, vector<16x32xf32>
    %11 = vector.broadcast %9 : vector<16x1xf32> to vector<16x32xf32>
    %12 = arith.mulf %10, %11 : vector<16x32xf32>
    %c0_5 = arith.constant 0 : index
    %c0_6 = arith.constant 0 : index
    %13 = vector.load %arg2[%c0_5, %c0_6] : memref<1x32xf32, #tpu.memory_space<vmem>>, vector<1x32xf32>
    %14 = vector.broadcast %13 : vector<1x32xf32> to vector<16x32xf32>
    %15 = arith.mulf %12, %14 : vector<16x32xf32>
    %c0_7 = arith.constant 0 : index
    %c0_8 = arith.constant 0 : index
    %16 = vector.load %arg3[%c0_7, %c0_8] : memref<1x32xf32, #tpu.memory_space<vmem>>, vector<1x32xf32>
    %17 = vector.broadcast %16 : vector<1x32xf32> to vector<16x32xf32>
    %18 = arith.addf %15, %17 : vector<16x32xf32>
    %c0_9 = arith.constant 0 : index
    %c0_10 = arith.constant 0 : index
    %19 = vector.load %arg4[%c0_9, %c0_10] : memref<16x32xf32, #tpu.memory_space<vmem>>, vector<16x32xf32>
    tpu.vector_store %arg4[%c0_9, %c0_10], %18 {strides = array<i32>} : memref<16x32xf32, #tpu.memory_space<vmem>>, vector<16x32xf32>,
    return
  }
  func.func @transform_0(%arg0: i32) -> (i32, i32) {
    %c0_i32 = arith.constant 0 : i32
    %c0_i32_0 = arith.constant 0 : i32
    return %arg0, %c0_i32 : i32, i32
  }
  func.func @transform_1(%arg0: i32) -> (i32, i32) {
    %c0_i32 = arith.constant 0 : i32
    %c0_i32_0 = arith.constant 0 : i32
    %c0_i32_1 = arith.constant 0 : i32
    return %c0_i32, %c0_i32_0 : i32, i32
  }
  func.func @transform_2(%arg0: i32) -> (i32, i32) {
    %c0_i32 = arith.constant 0 : i32
    %c0_i32_0 = arith.constant 0 : i32
    %c0_i32_1 = arith.constant 0 : i32
    return %c0_i32, %c0_i32_0 : i32, i32
  }
  func.func @transform_3(%arg0: i32) -> (i32, i32) {
    %c0_i32 = arith.constant 0 : i32
    %c0_i32_0 = arith.constant 0 : i32
    return %arg0, %c0_i32 : i32, i32
  }
}

</mosaic_0001>

<llo_original>
// kernel: tpu_custom_call.1
$region0: #{tpu_custom_call.1}
  #allocation0 [shape = 'u32[]', space=smem, size = 0x4, offset = 0x4, fixed_abs, tag = 'smem constant byte address 0x4 - core index']
  #allocation1 [shape = 'u32[144,128]{1,0:T(1,128)}', space=vmem, size = 0x12000, scoped, tag = 'internal scratch']
  %s0 = inlined_call_operand.hbm [shape: f32[16,32], index: 0, kind: input, shape index: {}]
  %s1 = inlined_call_operand.vmem [shape: f32[1,32], index: 1, kind: input, shape index: {}]
  %s2 = inlined_call_operand.vmem [shape: f32[1,32], index: 2, kind: input, shape index: {}]
  %s3 = inlined_call_operand.hbm [shape: f32[16,32], index: 3, kind: output, shape index: {}]
  %s4 = sld [smem:[#allocation0]]
  $region26: #{tpu_custom_call.1} parent=0
    _
  %s6 = ssub.s32 1, %s4
  %s7 = scalar_select 0, %s6, %s4
  $region1: #{tpu_custom_call.1} parent=0
    #allocation2 [shape = 'u8[8192]{0}', space=vmem, size = 0x2000, scoped, tag = 'input window, operand 0, single buffered']
    #allocation3 [shape = 's32[1]{0}', space=sflag, size = 0x4, scoped, tag = 'scoped memory for tpu_custom_call.1']
    #allocation4 [shape = 's32[1]{0}', space=sflag, size = 0x4, scoped, tag = 'scoped memory for tpu_custom_call.1']
    #allocation5 [shape = 'u8[8192]{0}', space=vmem, size = 0x2000, scoped, tag = 'output window, operand 0, single buffered']
    %8 = vsyncpa [#allocation3], 0
    %9 = vsyncpa [#allocation4], 0
    // Predicated region
    $region2: #{tpu_custom_call.1} parent=1 // pred_check
      _
    $region3: #{tpu_custom_call.1} parent=1 // pred_check_branch
      %11 = sbr.rel (0) target = $region5
    $region4: #{tpu_custom_call.1} parent=1 // pred_region
      %s13 = ssub.s32 256, 256
      %14 = vsyncadd [#allocation3], %s13
      %s15 = sshll.u32 [#allocation2], 4
      %s16 = int_to_ptr.vmem [resolvable:$true] %s15
      %21 = dma.hbm_to_vmem [thread:$0]  %s0, 256, %s16, [#allocation3], 128, 128, 8
    $region5: #{tpu_custom_call.1} parent=1 // pred_fallthru
      _
    // Predicated region
    $region6: #{tpu_custom_call.1} parent=1 // pred_check
      _
    $region7: #{tpu_custom_call.1} parent=1 // pred_check_branch
      %23 = sbr.rel (0) target = $region9
    $region8: #{tpu_custom_call.1} parent=1 // pred_region
      _
    $region9: #{tpu_custom_call.1} parent=1 // pred_fallthru
      _
    // Predicated region
    $region10: #{tpu_custom_call.1} parent=1 // pred_check
      _
    $region11: #{tpu_custom_call.1} parent=1 // pred_check_branch
      %25 = sbr.rel (0) target = $region13
    $region12: #{tpu_custom_call.1} parent=1 // pred_region
      _
    $region13: #{tpu_custom_call.1} parent=1 // pred_fallthru
      _
    // Predicated region
    $region14: #{tpu_custom_call.1} parent=1 // pred_check
      _
    $region15: #{tpu_custom_call.1} parent=1 // pred_check_branch
      %27 = sbr.rel (0) target = $region17
    $region16: #{tpu_custom_call.1} parent=1 // pred_region
      %28 = dma.done [#allocation3], 256
    $region17: #{tpu_custom_call.1} parent=1 // pred_fallthru
      _
    %v29 = vld [vmem:[#allocation2] sm:$0xff]
    %v30 = vld [vmem:[#allocation2 + $0x8] sm:$0xff]
    %v31 = vmul.f32 %v29, %v29
    %v32 = vmul.f32 %v30, %v30
    %vm33 = vcmask 261120
    %v34 = vsel %vm33, %v31, 0.0
    %35 = vadd.xlane.f32.xlu0 %v34
    %v36 = vpop.xlane.xlu0 %35
    %v37 = vsel %vm33, %v32, 0.0
    %38 = vadd.xlane.f32.xlu0 %v37
    %v39 = vpop.xlane.xlu0 %38
    %v40 = vrsqrt.pop %v36
    %v41 = vmul.f32 %v36, %v40
    %vm42 = vcmp.eq.f32.partialorder %v36, inf
    %v43 = vsel %vm42, %v36, %v41
    %vm44 = vcmp.eq.f32.partialorder %v36, 0.0
    %v45 = vand.u32 %v36, 2147483648
    %v46 = vsel %vm44, %v45, %v43
    %v47 = vrsqrt.pop %v39
    %v48 = vmul.f32 %v39, %v47
    %vm49 = vcmp.eq.f32.partialorder %v39, inf
    %v50 = vsel %vm49, %v39, %v48
    %vm51 = vcmp.eq.f32.partialorder %v39, 0.0
    %v52 = vand.u32 %v39, 2147483648
    %v53 = vsel %vm51, %v52, %v50
    %v54 = vmul.f32 %v46, 0.17677669
    %v55 = vmul.f32 %v53, 0.17677669
    %v56 = vadd.f32 %v54, 1e-08
    %v57 = vadd.f32 %v55, 1e-08
    %v58 = vrcp.pop %v56
    %v59 = vrcp.pop %v57
    %v60 = vmul.f32 %v29, %v58
    %v61 = vmul.f32 %v30, %v59
    %v62 = vld [vmem:[%s1] sm:$0x1]
    %v64 = vlaneseq
    %v65 = vshrl.u32 %v64, 7
    %v66 = vsub.s32 0, %v65
    %v67 = vrot.slane %v62, %v66
    %v69 = vmul.f32 %v60, %v67
    %v70 = vmul.f32 %v61, %v67
    %v71 = vld [vmem:[%s2] sm:$0x1]
    %v73 = vlaneseq
    %v74 = vshrl.u32 %v73, 7
    %v75 = vsub.s32 0, %v74
    %v76 = vrot.slane %v71, %v75
    %v78 = vadd.f32 %v69, %v76
    %v79 = vadd.f32 %v70, %v76
    %80 = vst.msk [vmem:[#allocation5] sm:$0xff] %vm33, %v78
    %81 = vst.msk [vmem:[#allocation5 + $0x8] sm:$0xff] %vm33, %v79
    // Predicated region
    $region18: #{tpu_custom_call.1} parent=1 // pred_check
      _
    $region19: #{tpu_custom_call.1} parent=1 // pred_check_branch
      %83 = sbr.rel (0) target = $region21
    $region20: #{tpu_custom_call.1} parent=1 // pred_region
      %s85 = ssub.s32 256, 256
      %86 = vsyncadd [#allocation4], %s85
      %s87 = sshll.u32 [#allocation5], 4
      %s88 = int_to_ptr.vmem [resolvable:$true] %s87
      %93 = dma.vmem_to_hbm [thread:$0]  %s88, 256, %s3, [#allocation4], 128, 128, 8
    $region21: #{tpu_custom_call.1} parent=1 // pred_fallthru
      _
    // Predicated region
    $region22: #{tpu_custom_call.1} parent=1 // pred_check
      _
    $region23: #{tpu_custom_call.1} parent=1 // pred_check_branch
      %95 = sbr.rel (0) target = $region25
    $region24: #{tpu_custom_call.1} parent=1 // pred_region
      %96 = dma.done [#allocation4], 256
    $region25: #{tpu_custom_call.1} parent=1 // pred_fallthru
      _
    %97 = vsyncpa [#allocation3], 1
    %98 = vsyncpa [#allocation4], 1

</llo_original>
